<compile_context>
chip_gen: v6e
topology: v6e:2x2x1
jax: 0.10.0
libtpu: 0.0.40
codegen_flags: <defaults>
</compile_context>

<pallas_src>
import jax
import jax.numpy as jnp
from jax import lax
from jax.experimental import pallas as pl
from jax.experimental.pallas import tpu as pltpu

LANE = 128  # lane-dense padded logit dimension


def _rnn_cls_kernel(xp_ref, w_hh_ref, w_out_ref, b_out_ref, out_ref):
    """One batch tile: full recurrence over T + fused (lane-padded) head.

    xp_ref   : (T, Bt, H) f32   precomputed x@W_ih^T + b_ih + b_hh
    w_hh_ref : (H, H)     bf16  W_hh^T
    w_out_ref: (H, 128)   bf16  W_out^T zero-padded to 128 lanes
    b_out_ref: (1, 128)   f32   b_out zero-padded to 128 lanes
    out_ref  : (Bt, 128)  f32   lane-dense logits (first 2 lanes meaningful)
    """
    T, Bt, H = xp_ref.shape

    def step(t, h):
        # Only the hidden matmul + tanh sit on the serial path.
        pre = xp_ref[t] + jnp.dot(h.astype(w_hh_ref.dtype), w_hh_ref[...],
                                  preferred_element_type=jnp.float32)
        return jnp.tanh(pre)                                   # f32 (Bt, H)

    h0 = jnp.zeros((Bt, H), jnp.float32)
    h_last = lax.fori_loop(0, T, step, h0, unroll=True)

    relu_h = jnp.maximum(h_last, 0.0)
    out_ref[...] = (jnp.dot(relu_h.astype(w_out_ref.dtype), w_out_ref[...],
                            preferred_element_type=jnp.float32)
                    + b_out_ref[...])


def rnn_text_classifier(token_ids, embeddings, w_ih, w_hh, b_ih, b_hh,
                        w_out, b_out):
    """Forward pass matching the PyTorch module.

    token_ids: (B, T) int32
    embeddings: (V, E) float32 (frozen)
    w_ih: (H, E), w_hh: (H, H), b_ih: (H,), b_hh: (H,)   -- torch.nn.RNN params
    w_out: (2, H), b_out: (2,)                           -- torch.nn.Linear params
    returns: (B, 2) float32 logits
    """
    B, T = token_ids.shape
    E = embeddings.shape[1]
    H = w_ih.shape[0]
    OUT = w_out.shape[0]

    # --- wrapper glue (XLA): gather directly into time-major, hoist the input
    # projection out of the recurrence, fold both RNN biases into it. --------
    x = jnp.take(embeddings, token_ids.T, axis=0).astype(jnp.float32)   # (T, B, E)
    bias = (b_ih + b_hh).astype(jnp.float32).reshape(1, 1, H)
    xp = jnp.einsum('tbe,eh->tbh', x, w_ih.T.astype(jnp.float32),
                    preferred_element_type=jnp.float32) + bias          # (T, B, H) f32

    # MXU operands for the in-kernel matmuls in bf16 (f32 accumulation).
    w_hh_t = w_hh.T.astype(jnp.bfloat16)                                # (H, H)
    # Lane-dense head: pad the 2-logit output dim to 128 lanes.
    w_out_pad = (jnp.zeros((H, LANE), jnp.float32)
                 .at[:, :OUT].set(w_out.T.astype(jnp.float32))
                 .astype(jnp.bfloat16))                                 # (H, 128)
    b_out_pad = (jnp.zeros((1, LANE), jnp.float32)
                 .at[:, :OUT].set(b_out.astype(jnp.float32)))           # (1, 128)

    # Batch tiling: two "parallel" grid points when B allows 8-row-aligned
    # halves, so v7x's two TensorCores each run half the batch.
    if B % 16 == 0:
        n_b, b_tile = 2, B // 2
    else:
        n_b, b_tile = 1, B

    out_pad = pl.pallas_call(
        _rnn_cls_kernel,
        out_shape=jax.ShapeDtypeStruct((B, LANE), jnp.float32),
        grid_spec=pltpu.PrefetchScalarGridSpec(
            num_scalar_prefetch=0,
            grid=(n_b,),
            in_specs=[
                pl.BlockSpec((T, b_tile, H), lambda b: (0, b, 0)),  # xp tile
                pl.BlockSpec((H, H), lambda b: (0, 0)),              # W_hh^T
                pl.BlockSpec((H, LANE), lambda b: (0, 0)),           # W_out^T (padded)
                pl.BlockSpec((1, LANE), lambda b: (0, 0)),           # b_out (padded)
            ],
            out_specs=pl.BlockSpec((b_tile, LANE), lambda b: (b, 0)),
        ),
        compiler_params=pltpu.CompilerParams(
            # Batch tiles are independent -> megacore/"parallel"; the serial
            # T recurrence lives entirely inside the kernel body.
            dimension_semantics=("parallel",)),
    )(xp, w_hh_t, w_out_pad, b_out_pad)

    return out_pad[:, :OUT]


def _reference(token_ids, embeddings, w_ih, w_hh, b_ih, b_hh, w_out, b_out):
    x = jnp.take(embeddings, token_ids, axis=0)      # (B, T, E)
    B = x.shape[0]
    H = w_ih.shape[0]

    def step(h, x_t):
        h_new = jnp.tanh(x_t @ w_ih.T + b_ih + h @ w_hh.T + b_hh)
        return h_new, None

    h0 = jnp.zeros((B, H), jnp.float32)
    h_last, _ = lax.scan(step, h0, jnp.transpose(x, (1, 0, 2)))
    return jnp.maximum(h_last, 0.0) @ w_out.T + b_out


if __name__ == "__main__":
    key = jax.random.PRNGKey(0)
    k_emb, k_ids, k_wih, k_whh, k_bih, k_bhh, k_wo, k_bo = jax.random.split(key, 8)

    V, E, H = 50, 32, 128         # vocab, embedding dim, hidden size (module default H=128)
    B, T = 16, 8                  # batch (exercises the 2-tile parallel path), sequence length

    embeddings = jax.random.normal(k_emb, (V, E), jnp.float32)
    token_ids = jax.random.randint(k_ids, (B, T), 0, V, jnp.int32)

    scale = 1.0 / jnp.sqrt(H)
    w_ih = jax.random.uniform(k_wih, (H, E), jnp.float32, -scale, scale)
    w_hh = jax.random.uniform(k_whh, (H, H), jnp.float32, -scale, scale)
    b_ih = jax.random.uniform(k_bih, (H,), jnp.float32, -scale, scale)
    b_hh = jax.random.uniform(k_bhh, (H,), jnp.float32, -scale, scale)
    w_out = jax.random.uniform(k_wo, (2, H), jnp.float32, -scale, scale)
    b_out = jax.random.uniform(k_bo, (2,), jnp.float32, -scale, scale)

    logits = rnn_text_classifier(token_ids, embeddings, w_ih, w_hh,
                                 b_ih, b_hh, w_out, b_out)
    logits = jax.block_until_ready(logits)

    ref = _reference(token_ids, embeddings, w_ih, w_hh, b_ih, b_hh, w_out, b_out)
    assert logits.shape == (B, 2)
    # bf16 MXU operands (f32 accumulation) -> widened tolerance vs pure-f32 reference.
    assert jnp.allclose(logits, ref, atol=2e-2, rtol=2e-2), "mismatch vs reference"

    print("KERNEL_OK")
</pallas_src>

<mosaic_0001>
module attributes {stable_mosaic.version = 11 : i64} {
  func.func @_rnn_cls_kernel(%arg0: i32, %arg1: memref<8x8x128xf32, #tpu.memory_space<vmem>>, %arg2: memref<128x128xbf16, #tpu.memory_space<vmem>>, %arg3: memref<128x128xbf16, #tpu.memory_space<vmem>>, %arg4: memref<1x128xf32, #tpu.memory_space<vmem>>, %arg5: memref<8x128xf32, #tpu.memory_space<vmem>>) attributes {dimension_semantics = [#tpu.dimension_semantics<parallel>], iteration_bounds = array<i64: 2>, scalar_prefetch = 0 : i64, scratch_operands = 0 : i64, tpu.core_type = #tpu.core_type<tc>, window_params = [{transform_indices = @transform_0, window_bounds = array<i64: 8, 8, 128>}, {pipeline_mode = #tpu.pipeline_mode<synchronous>, transform_indices = @transform_1, window_bounds = array<i64: 128, 128>}, {pipeline_mode = #tpu.pipeline_mode<synchronous>, transform_indices = @transform_2, window_bounds = array<i64: 128, 128>}, {pipeline_mode = #tpu.pipeline_mode<synchronous>, transform_indices = @transform_3, window_bounds = array<i64: 1, 128>}, {transform_indices = @transform_4, window_bounds = array<i64: 8, 128>}]} {
    %cst = arith.constant 0.000000e+00 : f32
    %0 = vector.broadcast %cst : f32 to vector<8x128xf32>
    %c0_i32 = arith.constant 0 : i32
    %1 = arith.index_cast %c0_i32 : i32 to index
    %c0 = arith.constant 0 : index
    %c0_0 = arith.constant 0 : index
    %2 = vector.load %arg1[%1, %c0, %c0_0] : memref<8x8x128xf32, #tpu.memory_space<vmem>>, vector<1x8x128xf32>
    %3 = vector.shape_cast %2 : vector<1x8x128xf32> to vector<8x128xf32>
    %4 = arith.truncf %0 : vector<8x128xf32> to vector<8x128xbf16>
    %c0_1 = arith.constant 0 : index
    %c0_2 = arith.constant 0 : index
    %5 = vector.load %arg2[%c0_1, %c0_2] : memref<128x128xbf16, #tpu.memory_space<vmem>>, vector<128x128xbf16>
    %cst_3 = arith.constant dense<0.000000e+00> : vector<8x128xf32>
    %6 = tpu.matmul %4, %5, %cst_3 {dimension_numbers = #tpu.dot_dimension_numbers<[1], [0], [0], [1], [0, 0, 1, 1], [], []>} : vector<8x128xbf16>, vector<128x128xbf16>, vector<8x128xf32> -> vector<8x128xf32>
    %7 = arith.addf %3, %6 : vector<8x128xf32>
    %8 = math.tanh %7 : vector<8x128xf32>
    %c1_i32 = arith.constant 1 : i32
    %9 = arith.index_cast %c1_i32 : i32 to index
    %c0_4 = arith.constant 0 : index
    %c0_5 = arith.constant 0 : index
    %10 = vector.load %arg1[%9, %c0_4, %c0_5] : memref<8x8x128xf32, #tpu.memory_space<vmem>>, vector<1x8x128xf32>
    %11 = vector.shape_cast %10 : vector<1x8x128xf32> to vector<8x128xf32>
    %12 = arith.truncf %8 : vector<8x128xf32> to vector<8x128xbf16>
    %c0_6 = arith.constant 0 : index
    %c0_7 = arith.constant 0 : index
    %13 = vector.load %arg2[%c0_6, %c0_7] : memref<128x128xbf16, #tpu.memory_space<vmem>>, vector<128x128xbf16>
    %cst_8 = arith.constant dense<0.000000e+00> : vector<8x128xf32>
    %14 = tpu.matmul %12, %13, %cst_8 {dimension_numbers = #tpu.dot_dimension_numbers<[1], [0], [0], [1], [0, 0, 1, 1], [], []>} : vector<8x128xbf16>, vector<128x128xbf16>, vector<8x128xf32> -> vector<8x128xf32>
    %15 = arith.addf %11, %14 : vector<8x128xf32>
    %16 = math.tanh %15 : vector<8x128xf32>
    %c2_i32 = arith.constant 2 : i32
    %17 = arith.index_cast %c2_i32 : i32 to index
    %c0_9 = arith.constant 0 : index
    %c0_10 = arith.constant 0 : index
    %18 = vector.load %arg1[%17, %c0_9, %c0_10] : memref<8x8x128xf32, #tpu.memory_space<vmem>>, vector<1x8x128xf32>
    %19 = vector.shape_cast %18 : vector<1x8x128xf32> to vector<8x128xf32>
    %20 = arith.truncf %16 : vector<8x128xf32> to vector<8x128xbf16>
    %c0_11 = arith.constant 0 : index
    %c0_12 = arith.constant 0 : index
    %21 = vector.load %arg2[%c0_11, %c0_12] : memref<128x128xbf16, #tpu.memory_space<vmem>>, vector<128x128xbf16>
    %cst_13 = arith.constant dense<0.000000e+00> : vector<8x128xf32>
    %22 = tpu.matmul %20, %21, %cst_13 {dimension_numbers = #tpu.dot_dimension_numbers<[1], [0], [0], [1], [0, 0, 1, 1], [], []>} : vector<8x128xbf16>, vector<128x128xbf16>, vector<8x128xf32> -> vector<8x128xf32>
    %23 = arith.addf %19, %22 : vector<8x128xf32>
    %24 = math.tanh %23 : vector<8x128xf32>
    %c3_i32 = arith.constant 3 : i32
    %25 = arith.index_cast %c3_i32 : i32 to index
    %c0_14 = arith.constant 0 : index
    %c0_15 = arith.constant 0 : index
    %26 = vector.load %arg1[%25, %c0_14, %c0_15] : memref<8x8x128xf32, #tpu.memory_space<vmem>>, vector<1x8x128xf32>
    %27 = vector.shape_cast %26 : vector<1x8x128xf32> to vector<8x128xf32>
    %28 = arith.truncf %24 : vector<8x128xf32> to vector<8x128xbf16>
    %c0_16 = arith.constant 0 : index
    %c0_17 = arith.constant 0 : index
    %29 = vector.load %arg2[%c0_16, %c0_17] : memref<128x128xbf16, #tpu.memory_space<vmem>>, vector<128x128xbf16>
    %cst_18 = arith.constant dense<0.000000e+00> : vector<8x128xf32>
    %30 = tpu.matmul %28, %29, %cst_18 {dimension_numbers = #tpu.dot_dimension_numbers<[1], [0], [0], [1], [0, 0, 1, 1], [], []>} : vector<8x128xbf16>, vector<128x128xbf16>, vector<8x128xf32> -> vector<8x128xf32>
    %31 = arith.addf %27, %30 : vector<8x128xf32>
    %32 = math.tanh %31 : vector<8x128xf32>
    %c4_i32 = arith.constant 4 : i32
    %33 = arith.index_cast %c4_i32 : i32 to index
    %c0_19 = arith.constant 0 : index
    %c0_20 = arith.constant 0 : index
    %34 = vector.load %arg1[%33, %c0_19, %c0_20] : memref<8x8x128xf32, #tpu.memory_space<vmem>>, vector<1x8x128xf32>
    %35 = vector.shape_cast %34 : vector<1x8x128xf32> to vector<8x128xf32>
    %36 = arith.truncf %32 : vector<8x128xf32> to vector<8x128xbf16>
    %c0_21 = arith.constant 0 : index
    %c0_22 = arith.constant 0 : index
    %37 = vector.load %arg2[%c0_21, %c0_22] : memref<128x128xbf16, #tpu.memory_space<vmem>>, vector<128x128xbf16>
    %cst_23 = arith.constant dense<0.000000e+00> : vector<8x128xf32>
    %38 = tpu.matmul %36, %37, %cst_23 {dimension_numbers = #tpu.dot_dimension_numbers<[1], [0], [0], [1], [0, 0, 1, 1], [], []>} : vector<8x128xbf16>, vector<128x128xbf16>, vector<8x128xf32> -> vector<8x128xf32>
    %39 = arith.addf %35, %38 : vector<8x128xf32>
    %40 = math.tanh %39 : vector<8x128xf32>
    %c5_i32 = arith.constant 5 : i32
    %41 = arith.index_cast %c5_i32 : i32 to index
    %c0_24 = arith.constant 0 : index
    %c0_25 = arith.constant 0 : index
    %42 = vector.load %arg1[%41, %c0_24, %c0_25] : memref<8x8x128xf32, #tpu.memory_space<vmem>>, vector<1x8x128xf32>
    %43 = vector.shape_cast %42 : vector<1x8x128xf32> to vector<8x128xf32>
    %44 = arith.truncf %40 : vector<8x128xf32> to vector<8x128xbf16>
    %c0_26 = arith.constant 0 : index
    %c0_27 = arith.constant 0 : index
    %45 = vector.load %arg2[%c0_26, %c0_27] : memref<128x128xbf16, #tpu.memory_space<vmem>>, vector<128x128xbf16>
    %cst_28 = arith.constant dense<0.000000e+00> : vector<8x128xf32>
    %46 = tpu.matmul %44, %45, %cst_28 {dimension_numbers = #tpu.dot_dimension_numbers<[1], [0], [0], [1], [0, 0, 1, 1], [], []>} : vector<8x128xbf16>, vector<128x128xbf16>, vector<8x128xf32> -> vector<8x128xf32>
    %47 = arith.addf %43, %46 : vector<8x128xf32>
    %48 = math.tanh %47 : vector<8x128xf32>
    %c6_i32 = arith.constant 6 : i32
    %49 = arith.index_cast %c6_i32 : i32 to index
    %c0_29 = arith.constant 0 : index
    %c0_30 = arith.constant 0 : index
    %50 = vector.load %arg1[%49, %c0_29, %c0_30] : memref<8x8x128xf32, #tpu.memory_space<vmem>>, vector<1x8x128xf32>
    %51 = vector.shape_cast %50 : vector<1x8x128xf32> to vector<8x128xf32>
    %52 = arith.truncf %48 : vector<8x128xf32> to vector<8x128xbf16>
    %c0_31 = arith.constant 0 : index
    %c0_32 = arith.constant 0 : index
    %53 = vector.load %arg2[%c0_31, %c0_32] : memref<128x128xbf16, #tpu.memory_space<vmem>>, vector<128x128xbf16>
    %cst_33 = arith.constant dense<0.000000e+00> : vector<8x128xf32>
    %54 = tpu.matmul %52, %53, %cst_33 {dimension_numbers = #tpu.dot_dimension_numbers<[1], [0], [0], [1], [0, 0, 1, 1], [], []>} : vector<8x128xbf16>, vector<128x128xbf16>, vector<8x128xf32> -> vector<8x128xf32>
    %55 = arith.addf %51, %54 : vector<8x128xf32>
    %56 = math.tanh %55 : vector<8x128xf32>
    %c7_i32 = arith.constant 7 : i32
    %57 = arith.index_cast %c7_i32 : i32 to index
    %c0_34 = arith.constant 0 : index
    %c0_35 = arith.constant 0 : index
    %58 = vector.load %arg1[%57, %c0_34, %c0_35] : memref<8x8x128xf32, #tpu.memory_space<vmem>>, vector<1x8x128xf32>
    %59 = vector.shape_cast %58 : vector<1x8x128xf32> to vector<8x128xf32>
    %60 = arith.truncf %56 : vector<8x128xf32> to vector<8x128xbf16>
    %c0_36 = arith.constant 0 : index
    %c0_37 = arith.constant 0 : index
    %61 = vector.load %arg2[%c0_36, %c0_37] : memref<128x128xbf16, #tpu.memory_space<vmem>>, vector<128x128xbf16>
    %cst_38 = arith.constant dense<0.000000e+00> : vector<8x128xf32>
    %62 = tpu.matmul %60, %61, %cst_38 {dimension_numbers = #tpu.dot_dimension_numbers<[1], [0], [0], [1], [0, 0, 1, 1], [], []>} : vector<8x128xbf16>, vector<128x128xbf16>, vector<8x128xf32> -> vector<8x128xf32>
    %63 = arith.addf %59, %62 : vector<8x128xf32>
    %64 = math.tanh %63 : vector<8x128xf32>
    %c8_i32 = arith.constant 8 : i32
    %cst_39 = arith.constant 0.000000e+00 : f32
    %65 = vector.broadcast %cst_39 : f32 to vector<8x128xf32>
    %66 = arith.maximumf %64, %65 : vector<8x128xf32>
    %67 = arith.truncf %66 : vector<8x128xf32> to vector<8x128xbf16>
    %c0_40 = arith.constant 0 : index
    %c0_41 = arith.constant 0 : index
    %68 = vector.load %arg3[%c0_40, %c0_41] : memref<128x128xbf16, #tpu.memory_space<vmem>>, vector<128x128xbf16>
    %cst_42 = arith.constant dense<0.000000e+00> : vector<8x128xf32>
    %69 = tpu.matmul %67, %68, %cst_42 {dimension_numbers = #tpu.dot_dimension_numbers<[1], [0], [0], [1], [0, 0, 1, 1], [], []>} : vector<8x128xbf16>, vector<128x128xbf16>, vector<8x128xf32> -> vector<8x128xf32>
    %c0_43 = arith.constant 0 : index
    %c0_44 = arith.constant 0 : index
    %70 = vector.load %arg4[%c0_43, %c0_44] : memref<1x128xf32, #tpu.memory_space<vmem>>, vector<1x128xf32>
    %71 = vector.broadcast %70 : vector<1x128xf32> to vector<8x128xf32>
    %72 = arith.addf %69, %71 : vector<8x128xf32>
    %c0_45 = arith.constant 0 : index
    %c0_46 = arith.constant 0 : index
    %73 = vector.load %arg5[%c0_45, %c0_46] : memref<8x128xf32, #tpu.memory_space<vmem>>, vector<8x128xf32>
    tpu.vector_store %arg5[%c0_45, %c0_46], %72 {strides = array<i32>} : memref<8x128xf32, #tpu.memory_space<vmem>>, vector<8x128xf32>,
    return
  }
  func.func @transform_0(%arg0: i32) -> (i32, i32, i32) {
    %c0_i32 = arith.constant 0 : i32
    %c0_i32_0 = arith.constant 0 : i32
    %c0_i32_1 = arith.constant 0 : i32
    return %c0_i32, %arg0, %c0_i32_0 : i32, i32, i32
  }
  func.func @transform_1(%arg0: i32) -> (i32, i32) {
    %c0_i32 = arith.constant 0 : i32
    %c0_i32_0 = arith.constant 0 : i32
    %c0_i32_1 = arith.constant 0 : i32
    return %c0_i32, %c0_i32_0 : i32, i32
  }
  func.func @transform_2(%arg0: i32) -> (i32, i32) {
    %c0_i32 = arith.constant 0 : i32
    %c0_i32_0 = arith.constant 0 : i32
    %c0_i32_1 = arith.constant 0 : i32
    return %c0_i32, %c0_i32_0 : i32, i32
  }
  func.func @transform_3(%arg0: i32) -> (i32, i32) {
    %c0_i32 = arith.constant 0 : i32
    %c0_i32_0 = arith.constant 0 : i32
    %c0_i32_1 = arith.constant 0 : i32
    return %c0_i32, %c0_i32_0 : i32, i32
  }
  func.func @transform_4(%arg0: i32) -> (i32, i32) {
    %c0_i32 = arith.constant 0 : i32
    %c0_i32_0 = arith.constant 0 : i32
    return %arg0, %c0_i32 : i32, i32
  }
}

</mosaic_0001>

<llo_original>
// kernel: tpu_custom_call.1
$region0: #{tpu_custom_call.1}
  #allocation0 [shape = 'u32[]', space=smem, size = 0x4, offset = 0x4, fixed_abs, tag = 'smem constant byte address 0x4 - core index']
  #allocation1 [shape = 'u32[144,128]{1,0:T(1,128)}', space=vmem, size = 0x12000, scoped, tag = 'internal scratch']
  %s0 = inlined_call_operand.hbm [shape: f32[8,16,128], index: 0, kind: input, shape index: {}]
  %s1 = inlined_call_operand.hbm [shape: bf16[128,128], index: 1, kind: input, shape index: {}]
  %s2 = inlined_call_operand.hbm [shape: bf16[128,128], index: 2, kind: input, shape index: {}]
  %s3 = inlined_call_operand.vmem [shape: f32[1,128], index: 3, kind: input, shape index: {}]
  %s4 = inlined_call_operand.hbm [shape: f32[16,128], index: 4, kind: output, shape index: {}]
  %s5 = sld [smem:[#allocation0]]
  $region61: #{tpu_custom_call.1} parent=0
    _
  %s7 = ssub.s32 1, %s5
  %s8 = scalar_select 0, %s7, %s5
  $region1: #{tpu_custom_call.1} parent=0
    #allocation2 [shape = 'u8[65536]{0}', space=vmem, size = 0x10000, scoped, tag = 'input window, operand 0']
    #allocation3 [shape = 's32[2]{0}', space=sflag, size = 0x8, scoped, tag = 'scoped memory for tpu_custom_call.1']
    #allocation4 [shape = 's32[2]{0}', space=sflag, size = 0x8, scoped, tag = 'scoped memory for tpu_custom_call.1']
    #allocation5 [shape = 'u8[32768]{0}', space=vmem, size = 0x8000, scoped, tag = 'input window, operand 1, single buffered']
    #allocation6 [shape = 's32[1]{0}', space=sflag, size = 0x4, scoped, tag = 'scoped memory for tpu_custom_call.1']
    #allocation7 [shape = 'u8[32768]{0}', space=vmem, size = 0x8000, scoped, tag = 'input window, operand 2, single buffered']
    #allocation8 [shape = 'u8[8192]{0}', space=vmem, size = 0x2000, scoped, tag = 'output window, operand 0']
    %9 = vsyncpa [#allocation3], 0
    %s10 = scalar_lea.sflag [#allocation3], 1
    %11 = vsyncpa %s10, 0
    %12 = vsyncpa [#allocation6], 0
    %13 = vsyncpa [#allocation4], 0
    %s14 = scalar_lea.sflag [#allocation4], 1
    %15 = vsyncpa %s14, 0
    loop: start=0, step=1, limit=4
    $region2: #{tpu_custom_call.1} parent=1 // loop_pre_header
      _
    $region3: #{tpu_custom_call.1} parent=1 // loop_header
      %s17 = sphi 0, %s21
      %p18 = scmp.ge.s32.totalorder %s17, 4
      %s27 = sphi 0, %s29
      %s30 = sphi 0, %s27
      %s31 = sphi 0, %s30
      %s47 = sphi 0, %s31
      %s51 = sphi 0, %s51
      %s53 = sphi 0, %s51
      %s54 = sphi 0, %s53
      %s68 = sphi 0, %s54
      %s72 = sphi 0, %s72
      %s74 = sphi 0, %s72
      %s75 = sphi 0, %s74
      %s89 = sphi 0, %s75
      %s93 = sphi 0, %s93
      %s95 = sphi 0, %s93
      %s96 = sphi 0, %s95
      %s110 = sphi 0, %s96
      %s116 = sphi 0, %s118
      %s119 = sphi 0, %s116
      %s120 = sphi 0, %s119
      %s136 = sphi 0, %s120
    $region4: #{tpu_custom_call.1} parent=1 // loop_header_branch
      %20 = sbr.rel (%p18) target = $region8
    $region5: #{tpu_custom_call.1} parent=1 // loop_body
      %s22 = ssub.s32 %s17, 1
      %s23 = ssub.s32 %s17, 2
      %s24 = sadd.s32 %s17, 1
      %s25 = ssub.s32 %s17, %s24
      %p26 = scmp.eq.s32.totalorder %s25, 0
      %s28 = sadd.s32 %s27, 1
      %s29 = scalar_select %p26, %s27, %s28
      %p32 = pneg %p26
      %p33 = scmp.eq.s32.totalorder %s17, 1
      %p34 = por %p32, %p33
      %p35 = scmp.ne.s32.totalorder %s27, %s30
      %p36 = scmp.eq.s32.totalorder %s17, 0
      %p37 = por %p35, %p36
      %p38 = scmp.ne.s32.totalorder %s27, %s30
      %p39 = scmp.eq.s32.totalorder %s22, 1
      %p40 = por %p38, %p39
      %p41 = scmp.ne.s32.totalorder %s30, %s31
      %p42 = scmp.eq.s32.totalorder %s22, 0
      %p43 = por %p41, %p42
      %p44 = scmp.ne.s32.totalorder %s30, %s31
      %p45 = scmp.eq.s32.totalorder %s23, 1
      %p46 = por %p44, %p45
      %p48 = scmp.ne.s32.totalorder %s31, %s47
      %p49 = scmp.eq.s32.totalorder %s23, 0
      %p50 = por %p48, %p49
      %s52 = sadd.s32 %s51, 1
      %p55 = scmp.eq.s32.totalorder %s17, 1
      %p56 = scmp.ne.s32.totalorder %s51, %s53
      %p57 = scmp.eq.s32.totalorder %s17, 0
      %p58 = por %p56, %p57
      %p59 = scmp.ne.s32.totalorder %s51, %s53
      %p60 = scmp.eq.s32.totalorder %s22, 1
      %p61 = por %p59, %p60
      %p62 = scmp.ne.s32.totalorder %s53, %s54
      %p63 = scmp.eq.s32.totalorder %s22, 0
      %p64 = por %p62, %p63
      %p65 = scmp.ne.s32.totalorder %s53, %s54
      %p66 = scmp.eq.s32.totalorder %s23, 1
      %p67 = por %p65, %p66
      %p69 = scmp.ne.s32.totalorder %s54, %s68
      %p70 = scmp.eq.s32.totalorder %s23, 0
      %p71 = por %p69, %p70
      %s73 = sadd.s32 %s72, 1
      %p76 = scmp.eq.s32.totalorder %s17, 1
      %p77 = scmp.ne.s32.totalorder %s72, %s74
      %p78 = scmp.eq.s32.totalorder %s17, 0
      %p79 = por %p77, %p78
      %p80 = scmp.ne.s32.totalorder %s72, %s74
      %p81 = scmp.eq.s32.totalorder %s22, 1
      %p82 = por %p80, %p81
      %p83 = scmp.ne.s32.totalorder %s74, %s75
      %p84 = scmp.eq.s32.totalorder %s22, 0
      %p85 = por %p83, %p84
      %p86 = scmp.ne.s32.totalorder %s74, %s75
      %p87 = scmp.eq.s32.totalorder %s23, 1
      %p88 = por %p86, %p87
      %p90 = scmp.ne.s32.totalorder %s75, %s89
      %p91 = scmp.eq.s32.totalorder %s23, 0
      %p92 = por %p90, %p91
      %s94 = sadd.s32 %s93, 1
      %p97 = scmp.eq.s32.totalorder %s17, 1
      %p98 = scmp.ne.s32.totalorder %s93, %s95
      %p99 = scmp.eq.s32.totalorder %s17, 0
      %p100 = por %p98, %p99
      %p101 = scmp.ne.s32.totalorder %s93, %s95
      %p102 = scmp.eq.s32.totalorder %s22, 1
      %p103 = por %p101, %p102
      %p104 = scmp.ne.s32.totalorder %s95, %s96
      %p105 = scmp.eq.s32.totalorder %s22, 0
      %p106 = por %p104, %p105
      %p107 = scmp.ne.s32.totalorder %s95, %s96
      %p108 = scmp.eq.s32.totalorder %s23, 1
      %p109 = por %p107, %p108
      %p111 = scmp.ne.s32.totalorder %s96, %s110
      %p112 = scmp.eq.s32.totalorder %s23, 0
      %p113 = por %p111, %p112
      %s114 = ssub.s32 %s17, %s24
      %p115 = scmp.eq.s32.totalorder %s114, 0
      %s117 = sadd.s32 %s116, 1
      %s118 = scalar_select %p115, %s116, %s117
      %p121 = pneg %p115
      %p122 = scmp.eq.s32.totalorder %s17, 1
      %p123 = por %p121, %p122
      %p124 = scmp.ne.s32.totalorder %s116, %s119
      %p125 = scmp.eq.s32.totalorder %s17, 0
      %p126 = por %p124, %p125
      %p127 = scmp.ne.s32.totalorder %s116, %s119
      %p128 = scmp.eq.s32.totalorder %s22, 1
      %p129 = por %p127, %p128
      %p130 = scmp.ne.s32.totalorder %s119, %s120
      %p131 = scmp.eq.s32.totalorder %s22, 0
      %p132 = por %p130, %p131
      %p133 = scmp.ne.s32.totalorder %s119, %s120
      %p134 = scmp.eq.s32.totalorder %s23, 1
      %p135 = por %p133, %p134
      %p137 = scmp.ne.s32.totalorder %s120, %s136
      %p138 = scmp.eq.s32.totalorder %s23, 0
      %p139 = por %p137, %p138
      %p140 = scmp.le.s32.totalorder 1, %s17
      %p141 = scmp.lt.s32.totalorder %s17, 3
      %p142 = pnand %p140, %p141
      %p143 = pneg %p142
      // Predicated region
      $region9: #{tpu_custom_call.1} parent=5 // pred_check
        _
      $region10: #{tpu_custom_call.1} parent=5 // pred_check_branch
        %145 = sbr.rel (%p142) target = $region12
      $region11: #{tpu_custom_call.1} parent=5 // pred_region
        %s146 = ssub.s32 %s17, 1
        // Predicated region
        $region13: #{tpu_custom_call.1} parent=11 // pred_check
          %p147 = pneg %p64
        $region14: #{tpu_custom_call.1} parent=11 // pred_check_branch
          %149 = sbr.rel (%p147) target = $region16
        $region15: #{tpu_custom_call.1} parent=11 // pred_region
          %s151 = ssub.s32 1024, 1024
          %152 = vsyncadd [#allocation6], %s151
          %s153 = sshll.u32 [#allocation5], 4
          %s154 = int_to_ptr.vmem [resolvable:$true] %s153
          %159 = dma.hbm_to_vmem [thread:$0]  %s1, 1024, %s154, [#allocation6], 64, 64, 4
        $region16: #{tpu_custom_call.1} parent=11 // pred_fallthru
          _
        // Predicated region
        $region17: #{tpu_custom_call.1} parent=11 // pred_check
          %p160 = pneg %p85
        $region18: #{tpu_custom_call.1} parent=11 // pred_check_branch
          %162 = sbr.rel (%p160) target = $region20
        $region19: #{tpu_custom_call.1} parent=11 // pred_region
          %s164 = ssub.s32 1024, 1024
          %165 = vsyncadd [#allocation6], %s164
          %s166 = sshll.u32 [#allocation7], 4
          %s167 = int_to_ptr.vmem [resolvable:$true] %s166
          %172 = dma.hbm_to_vmem [thread:$0]  %s2, 1024, %s167, [#allocation6], 64, 64, 4
        $region20: #{tpu_custom_call.1} parent=11 // pred_fallthru
          _
        // Predicated region
        $region21: #{tpu_custom_call.1} parent=11 // pred_check
          %p173 = pneg %p106
        $region22: #{tpu_custom_call.1} parent=11 // pred_check_branch
          %175 = sbr.rel (%p173) target = $region24
        $region23: #{tpu_custom_call.1} parent=11 // pred_region
          _
        $region24: #{tpu_custom_call.1} parent=11 // pred_fallthru
          _
      $region12: #{tpu_custom_call.1} parent=5 // pred_fallthru
        _
      %p176 = scmp.lt.s32.totalorder %s17, 2
      // Predicated region
      $region25: #{tpu_custom_call.1} parent=5 // pred_check
        %p177 = pneg %p176
      $region26: #{tpu_custom_call.1} parent=5 // pred_check_branch
        %179 = sbr.rel (%p177) target = $region28
      $region27: #{tpu_custom_call.1} parent=5 // pred_region
        // Predicated region
        $region29: #{tpu_custom_call.1} parent=27 // pred_check
          %p180 = pneg %p37
        $region30: #{tpu_custom_call.1} parent=27 // pred_check_branch
          %182 = sbr.rel (%p180) target = $region32
        $region31: #{tpu_custom_call.1} parent=27 // pred_region
          %s183 = sand.u32 %s27, 1
          %s184 = scalar_lea.sflag [#allocation3], %s183
          %s185 = sand.u32 %s27, 1
          %s186 = smul.addr %s185, 64
          %s187 = scalar_lea.vmem [#allocation2], %s186
          %s189 = ssub.s32 1024, 1024
          %190 = vsyncadd %s184, %s189
          %s191 = smul.addr %s17, 128
          %s192 = scalar_lea.hbm %s0, %s191
          %s193 = sshll.u32 %s187, 4
          %s194 = int_to_ptr.vmem [resolvable:$true] %s193
          %199 = dma.hbm_to_vmem [thread:$0]  %s192, 1024, %s194, %s184, 256, 128, 8
        $region32: #{tpu_custom_call.1} parent=27 // pred_fallthru
          _
      $region28: #{tpu_custom_call.1} parent=5 // pred_fallthru
        _
      %p200 = scmp.le.s32.totalorder 1, %s17
      %p201 = scmp.lt.s32.totalorder %s17, 3
      %p202 = pnand %p200, %p201
      %p203 = pneg %p202
      // Predicated region
      $region33: #{tpu_custom_call.1} parent=5 // pred_check
        _
      $region34: #{tpu_custom_call.1} parent=5 // pred_check_branch
        %205 = sbr.rel (%p202) target = $region36
      $region35: #{tpu_custom_call.1} parent=5 // pred_region
        %s206 = ssub.s32 %s17, 1
        %s207 = sand.u32 %s30, 1
        %s208 = scalar_lea.sflag [#allocation3], %s207
        %s209 = sand.u32 %s30, 1
        %s210 = smul.addr %s209, 64
        %s211 = scalar_lea.vmem [#allocation2], %s210
        // Predicated region
        $region37: #{tpu_custom_call.1} parent=35 // pred_check
          %p212 = pneg %p43
        $region38: #{tpu_custom_call.1} parent=35 // pred_check_branch
          %214 = sbr.rel (%p212) target = $region40
        $region39: #{tpu_custom_call.1} parent=35 // pred_region
          %215 = dma.done %s208, 1024
        $region40: #{tpu_custom_call.1} parent=35 // pred_fallthru
          _
        // Predicated region
        $region41: #{tpu_custom_call.1} parent=35 // pred_check
          %p216 = pneg %p64
        $region42: #{tpu_custom_call.1} parent=35 // pred_check_branch
          %218 = sbr.rel (%p216) target = $region44
        $region43: #{tpu_custom_call.1} parent=35 // pred_region
          %219 = dma.done [#allocation6], 1024
        $region44: #{tpu_custom_call.1} parent=35 // pred_fallthru
          _
        // Predicated region
        $region45: #{tpu_custom_call.1} parent=35 // pred_check
          %p220 = pneg %p85
        $region46: #{tpu_custom_call.1} parent=35 // pred_check_branch
          %222 = sbr.rel (%p220) target = $region48
        $region47: #{tpu_custom_call.1} parent=35 // pred_region
          %223 = dma.done [#allocation6], 1024
        $region48: #{tpu_custom_call.1} parent=35 // pred_fallthru
          _
        %s224 = sand.u32 %s30, 1
        %s225 = scalar_lea.sflag [#allocation3], %s224
        %s226 = sand.u32 %s30, 1
        %s227 = smul.addr %s226, 64
        %s228 = scalar_lea.vmem [#allocation2], %s227
        %p229 = pneg %p43
        %p230 = pneg %p40
        %p231 = pneg %p64
        %p232 = pneg %p61
        %p233 = pneg %p85
        %p234 = pneg %p82
        %p235 = pneg %p106
        %p236 = pneg %p103
        %p237 = pneg %p132
        %p238 = pneg %p129
        %s239 = sand.u32 %s119, 1
        %s240 = scalar_lea.sflag [#allocation4], %s239
        %s241 = sand.u32 %s119, 1
        %s242 = smul.addr %s241, 8
        %s243 = scalar_lea.vmem [#allocation8], %s242
        %v245 = vld [vmem:[%s211] sm:$0xff]
        %v246 = vld [vmem:[#allocation5] sm:$0xf]
        %v247 = vld [vmem:[#allocation5 + $0x4] sm:$0xf]
        %v248 = vld [vmem:[#allocation5 + $0x8] sm:$0xf]
        %v249 = vld [vmem:[#allocation5 + $0xc] sm:$0xf]
        %v250 = vld [vmem:[#allocation5 + $0x10] sm:$0xf]
        %v251 = vld [vmem:[#allocation5 + $0x14] sm:$0xf]
        %v252 = vld [vmem:[#allocation5 + $0x18] sm:$0xf]
        %v253 = vld [vmem:[#allocation5 + $0x1c] sm:$0xf]
        %v254 = vld [vmem:[#allocation5 + $0x20] sm:$0xf]
        %v255 = vld [vmem:[#allocation5 + $0x24] sm:$0xf]
        %v256 = vld [vmem:[#allocation5 + $0x28] sm:$0xf]
        %v257 = vld [vmem:[#allocation5 + $0x2c] sm:$0xf]
        %v258 = vld [vmem:[#allocation5 + $0x30] sm:$0xf]
        %v259 = vld [vmem:[#allocation5 + $0x34] sm:$0xf]
        %v260 = vld [vmem:[#allocation5 + $0x38] sm:$0xf]
        %v261 = vld [vmem:[#allocation5 + $0x3c] sm:$0xf]
        %v278 = vunpack.c.l.b16 %v246
        %v279 = vunpack.c.l.b16 %v247
        %v280 = vunpack.c.l.b16 %v248
        %v281 = vunpack.c.l.b16 %v249
        %v282 = vunpack.c.l.b16 %v250
        %v283 = vunpack.c.l.b16 %v251
        %v284 = vunpack.c.l.b16 %v252
        %v285 = vunpack.c.l.b16 %v253
        %v286 = vunpack.c.l.b16 %v254
        %v287 = vunpack.c.l.b16 %v255
        %v288 = vunpack.c.l.b16 %v256
        %v289 = vunpack.c.l.b16 %v257
        %v290 = vunpack.c.l.b16 %v258
        %v291 = vunpack.c.l.b16 %v259
        %v292 = vunpack.c.l.b16 %v260
        %v293 = vunpack.c.l.b16 %v261
        %v294 = vpack.c.b16 %v279, %v278
        %v295 = vpack.c.b16 %v281, %v280
        %v296 = vpack.c.b16 %v283, %v282
        %v297 = vpack.c.b16 %v285, %v284
        %v298 = vpack.c.b16 %v287, %v286
        %v299 = vpack.c.b16 %v289, %v288
        %v300 = vpack.c.b16 %v291, %v290
        %v301 = vpack.c.b16 %v293, %v292
        %310 = vmatprep.subr.bf16.mxu0 0
        %311 = vmatpush1.bf16.msra.mxu0 %v301
        %312 = vmatprep.subr.bf16.mxu0 0
        %313 = vmatpush1.bf16.msra.mxu0 %v300
        %314 = vmatprep.subr.bf16.mxu0 0
        %315 = vmatpush1.bf16.msra.mxu0 %v299
        %316 = vmatprep.subr.bf16.mxu0 0
        %317 = vmatpush1.bf16.msra.mxu0 %v298
        %318 = vmatprep.subr.bf16.mxu0 0
        %319 = vmatpush1.bf16.msra.mxu0 %v297
        %320 = vmatprep.subr.bf16.mxu0 0
        %321 = vmatpush1.bf16.msra.mxu0 %v296
        %322 = vmatprep.subr.bf16.mxu0 0
        %323 = vmatpush1.bf16.msra.mxu0 %v295
        %324 = vmatprep.subr.bf16.mxu0 0
        %325 = vmatpush1.bf16.msra.mxu0 %v294
        %326 = vmatprep.subr.bf16.mxu0 0
        %327 = vmatpush2.bf16.msra.mxu0 0
        %328 = vmatprep.subr.bf16.mxu0 0
        %329 = vmatpush2.bf16.msra.mxu0 0
        %330 = vmatprep.subr.bf16.mxu0 0
        %331 = vmatpush2.bf16.msra.mxu0 0
        %332 = vmatprep.subr.bf16.mxu0 0
        %333 = vmatpush2.bf16.msra.mxu0 0
        %334 = vmatprep.subr.bf16.mxu0 0
        %335 = vmatpush2.bf16.msra.mxu0 0
        %336 = vmatprep.subr.bf16.mxu0 0
        %337 = vmatpush2.bf16.msra.mxu0 0
        %338 = vmatprep.subr.bf16.mxu0 0
        %339 = vmatpush2.bf16.msra.mxu0 0
        %340 = vmatprep.subr.bf16.mxu0 0
        %341 = vmatpush2.bf16.msra.mxu0 0
        %342 = vmatprep.mubr.bf16.mxu0 0
        %343 = vmatmul.mubr.bf16.gmra.mxu0 0
        %v344 = vpop.f32.mrf.mxu0
        %v345 = vadd.f32 0.0, %v344
        %v346 = vpop.f32.mrf.mxu0
        %v347 = vpop.f32.mrf.mxu0
        %v348 = vpop.f32.mrf.mxu0
        %349 = vdwg.mxu0
        %v350 = vadd.f32 %v245, %v345
        %v351 = vtanh.pop %v350
        %s352 = scalar_lea.vmem %s211, 8 [#allocation2]
        %v353 = vld [vmem:[%s352] sm:$0xff]
        %v354 = vpack.c.bf16 %v351, %v351
        %355 = vmatprep.subr.bf16.mxu0 0
        %356 = vmatpush1.bf16.msra.mxu0 %v301
        %357 = vmatprep.subr.bf16.mxu0 0
        %358 = vmatpush1.bf16.msra.mxu0 %v300
        %359 = vmatprep.subr.bf16.mxu0 0
        %360 = vmatpush1.bf16.msra.mxu0 %v299
        %361 = vmatprep.subr.bf16.mxu0 0
        %362 = vmatpush1.bf16.msra.mxu0 %v298
        %363 = vmatprep.subr.bf16.mxu0 0
        %364 = vmatpush1.bf16.msra.mxu0 %v297
        %365 = vmatprep.subr.bf16.mxu0 0
        %366 = vmatpush1.bf16.msra.mxu0 %v296
        %367 = vmatprep.subr.bf16.mxu0 0
        %368 = vmatpush1.bf16.msra.mxu0 %v295
        %369 = vmatprep.subr.bf16.mxu0 0
        %370 = vmatpush1.bf16.msra.mxu0 %v294
        %371 = vmatprep.subr.bf16.mxu0 0
        %372 = vmatpush2.bf16.msra.mxu0 0
        %373 = vmatprep.subr.bf16.mxu0 0
        %374 = vmatpush2.bf16.msra.mxu0 0
        %375 = vmatprep.subr.bf16.mxu0 0
        %376 = vmatpush2.bf16.msra.mxu0 0
        %377 = vmatprep.subr.bf16.mxu0 0
        %378 = vmatpush2.bf16.msra.mxu0 0
        %379 = vmatprep.subr.bf16.mxu0 0
        %380 = vmatpush2.bf16.msra.mxu0 0
        %381 = vmatprep.subr.bf16.mxu0 0
        %382 = vmatpush2.bf16.msra.mxu0 0
        %383 = vmatprep.subr.bf16.mxu0 0
        %384 = vmatpush2.bf16.msra.mxu0 0
        %385 = vmatprep.subr.bf16.mxu0 0
        %386 = vmatpush2.bf16.msra.mxu0 0
        %387 = vmatprep.mubr.bf16.mxu0 0
        %388 = vmatmul.mubr.bf16.gmra.mxu0 %v354
        %v389 = vpop.f32.mrf.mxu0
        %v390 = vadd.f32 0.0, %v389
        %v391 = vpop.f32.mrf.mxu0
        %v392 = vpop.f32.mrf.mxu0
        %v393 = vpop.f32.mrf.mxu0
        %394 = vdwg.mxu0
        %v395 = vadd.f32 %v353, %v390
        %v396 = vtanh.pop %v395
        %s397 = scalar_lea.vmem %s211, 16 [#allocation2]
        %v398 = vld [vmem:[%s397] sm:$0xff]
        %v399 = vpack.c.bf16 %v396, %v396
        %400 = vmatprep.subr.bf16.mxu0 0
        %401 = vmatpush1.bf16.msra.mxu0 %v301
        %402 = vmatprep.subr.bf16.mxu0 0
        %403 = vmatpush1.bf16.msra.mxu0 %v300
        %404 = vmatprep.subr.bf16.mxu0 0
        %405 = vmatpush1.bf16.msra.mxu0 %v299
        %406 = vmatprep.subr.bf16.mxu0 0
        %407 = vmatpush1.bf16.msra.mxu0 %v298
        %408 = vmatprep.subr.bf16.mxu0 0
        %409 = vmatpush1.bf16.msra.mxu0 %v297
        %410 = vmatprep.subr.bf16.mxu0 0
        %411 = vmatpush1.bf16.msra.mxu0 %v296
        %412 = vmatprep.subr.bf16.mxu0 0
        %413 = vmatpush1.bf16.msra.mxu0 %v295
        %414 = vmatprep.subr.bf16.mxu0 0
        %415 = vmatpush1.bf16.msra.mxu0 %v294
        %416 = vmatprep.subr.bf16.mxu0 0
        %417 = vmatpush2.bf16.msra.mxu0 0
        %418 = vmatprep.subr.bf16.mxu0 0
        %419 = vmatpush2.bf16.msra.mxu0 0
        %420 = vmatprep.subr.bf16.mxu0 0
        %421 = vmatpush2.bf16.msra.mxu0 0
        %422 = vmatprep.subr.bf16.mxu0 0
        %423 = vmatpush2.bf16.msra.mxu0 0
        %424 = vmatprep.subr.bf16.mxu0 0
        %425 = vmatpush2.bf16.msra.mxu0 0
        %426 = vmatprep.subr.bf16.mxu0 0
        %427 = vmatpush2.bf16.msra.mxu0 0
        %428 = vmatprep.subr.bf16.mxu0 0
        %429 = vmatpush2.bf16.msra.mxu0 0
        %430 = vmatprep.subr.bf16.mxu0 0
        %431 = vmatpush2.bf16.msra.mxu0 0
        %432 = vmatprep.mubr.bf16.mxu0 0
        %433 = vmatmul.mubr.bf16.gmra.mxu0 %v399
        %v434 = vpop.f32.mrf.mxu0
        %v435 = vadd.f32 0.0, %v434
        %v436 = vpop.f32.mrf.mxu0
        %v437 = vpop.f32.mrf.mxu0
        %v438 = vpop.f32.mrf.mxu0
        %439 = vdwg.mxu0
        %v440 = vadd.f32 %v398, %v435
        %v441 = vtanh.pop %v440
        %s442 = scalar_lea.vmem %s211, 24 [#allocation2]
        %v443 = vld [vmem:[%s442] sm:$0xff]
        %v444 = vpack.c.bf16 %v441, %v441
        %445 = vmatprep.subr.bf16.mxu0 0
        %446 = vmatpush1.bf16.msra.mxu0 %v301
        %447 = vmatprep.subr.bf16.mxu0 0
        %448 = vmatpush1.bf16.msra.mxu0 %v300
        %449 = vmatprep.subr.bf16.mxu0 0
        %450 = vmatpush1.bf16.msra.mxu0 %v299
        %451 = vmatprep.subr.bf16.mxu0 0
        %452 = vmatpush1.bf16.msra.mxu0 %v298
        %453 = vmatprep.subr.bf16.mxu0 0
        %454 = vmatpush1.bf16.msra.mxu0 %v297
        %455 = vmatprep.subr.bf16.mxu0 0
        %456 = vmatpush1.bf16.msra.mxu0 %v296
        %457 = vmatprep.subr.bf16.mxu0 0
        %458 = vmatpush1.bf16.msra.mxu0 %v295
        %459 = vmatprep.subr.bf16.mxu0 0
        %460 = vmatpush1.bf16.msra.mxu0 %v294
        %461 = vmatprep.subr.bf16.mxu0 0
        %462 = vmatpush2.bf16.msra.mxu0 0
        %463 = vmatprep.subr.bf16.mxu0 0
        %464 = vmatpush2.bf16.msra.mxu0 0
        %465 = vmatprep.subr.bf16.mxu0 0
        %466 = vmatpush2.bf16.msra.mxu0 0
        %467 = vmatprep.subr.bf16.mxu0 0
        %468 = vmatpush2.bf16.msra.mxu0 0
        %469 = vmatprep.subr.bf16.mxu0 0
        %470 = vmatpush2.bf16.msra.mxu0 0
        %471 = vmatprep.subr.bf16.mxu0 0
        %472 = vmatpush2.bf16.msra.mxu0 0
        %473 = vmatprep.subr.bf16.mxu0 0
        %474 = vmatpush2.bf16.msra.mxu0 0
        %475 = vmatprep.subr.bf16.mxu0 0
        %476 = vmatpush2.bf16.msra.mxu0 0
        %477 = vmatprep.mubr.bf16.mxu0 0
        %478 = vmatmul.mubr.bf16.gmra.mxu0 %v444
        %v479 = vpop.f32.mrf.mxu0
        %v480 = vadd.f32 0.0, %v479
        %v481 = vpop.f32.mrf.mxu0
        %v482 = vpop.f32.mrf.mxu0
        %v483 = vpop.f32.mrf.mxu0
        %484 = vdwg.mxu0
        %v485 = vadd.f32 %v443, %v480
        %v486 = vtanh.pop %v485
        %s487 = scalar_lea.vmem %s211, 32 [#allocation2]
        %v488 = vld [vmem:[%s487] sm:$0xff]
        %v489 = vpack.c.bf16 %v486, %v486
        %490 = vmatprep.subr.bf16.mxu0 0
        %491 = vmatpush1.bf16.msra.mxu0 %v301
        %492 = vmatprep.subr.bf16.mxu0 0
        %493 = vmatpush1.bf16.msra.mxu0 %v300
        %494 = vmatprep.subr.bf16.mxu0 0
        %495 = vmatpush1.bf16.msra.mxu0 %v299
        %496 = vmatprep.subr.bf16.mxu0 0
        %497 = vmatpush1.bf16.msra.mxu0 %v298
        %498 = vmatprep.subr.bf16.mxu0 0
        %499 = vmatpush1.bf16.msra.mxu0 %v297
        %500 = vmatprep.subr.bf16.mxu0 0
        %501 = vmatpush1.bf16.msra.mxu0 %v296
        %502 = vmatprep.subr.bf16.mxu0 0
        %503 = vmatpush1.bf16.msra.mxu0 %v295
        %504 = vmatprep.subr.bf16.mxu0 0
        %505 = vmatpush1.bf16.msra.mxu0 %v294
        %506 = vmatprep.subr.bf16.mxu0 0
        %507 = vmatpush2.bf16.msra.mxu0 0
        %508 = vmatprep.subr.bf16.mxu0 0
        %509 = vmatpush2.bf16.msra.mxu0 0
        %510 = vmatprep.subr.bf16.mxu0 0
        %511 = vmatpush2.bf16.msra.mxu0 0
        %512 = vmatprep.subr.bf16.mxu0 0
        %513 = vmatpush2.bf16.msra.mxu0 0
        %514 = vmatprep.subr.bf16.mxu0 0
        %515 = vmatpush2.bf16.msra.mxu0 0
        %516 = vmatprep.subr.bf16.mxu0 0
        %517 = vmatpush2.bf16.msra.mxu0 0
        %518 = vmatprep.subr.bf16.mxu0 0
        %519 = vmatpush2.bf16.msra.mxu0 0
        %520 = vmatprep.subr.bf16.mxu0 0
        %521 = vmatpush2.bf16.msra.mxu0 0
        %522 = vmatprep.mubr.bf16.mxu0 0
        %523 = vmatmul.mubr.bf16.gmra.mxu0 %v489
        %v524 = vpop.f32.mrf.mxu0
        %v525 = vadd.f32 0.0, %v524
        %v526 = vpop.f32.mrf.mxu0
        %v527 = vpop.f32.mrf.mxu0
        %v528 = vpop.f32.mrf.mxu0
        %529 = vdwg.mxu0
        %v530 = vadd.f32 %v488, %v525
        %v531 = vtanh.pop %v530
        %s532 = scalar_lea.vmem %s211, 40 [#allocation2]
        %v533 = vld [vmem:[%s532] sm:$0xff]
        %v534 = vpack.c.bf16 %v531, %v531
        %535 = vmatprep.subr.bf16.mxu0 0
        %536 = vmatpush1.bf16.msra.mxu0 %v301
        %537 = vmatprep.subr.bf16.mxu0 0
        %538 = vmatpush1.bf16.msra.mxu0 %v300
        %539 = vmatprep.subr.bf16.mxu0 0
        %540 = vmatpush1.bf16.msra.mxu0 %v299
        %541 = vmatprep.subr.bf16.mxu0 0
        %542 = vmatpush1.bf16.msra.mxu0 %v298
        %543 = vmatprep.subr.bf16.mxu0 0
        %544 = vmatpush1.bf16.msra.mxu0 %v297
        %545 = vmatprep.subr.bf16.mxu0 0
        %546 = vmatpush1.bf16.msra.mxu0 %v296
        %547 = vmatprep.subr.bf16.mxu0 0
        %548 = vmatpush1.bf16.msra.mxu0 %v295
        %549 = vmatprep.subr.bf16.mxu0 0
        %550 = vmatpush1.bf16.msra.mxu0 %v294
        %551 = vmatprep.subr.bf16.mxu0 0
        %552 = vmatpush2.bf16.msra.mxu0 0
        %553 = vmatprep.subr.bf16.mxu0 0
        %554 = vmatpush2.bf16.msra.mxu0 0
        %555 = vmatprep.subr.bf16.mxu0 0
        %556 = vmatpush2.bf16.msra.mxu0 0
        %557 = vmatprep.subr.bf16.mxu0 0
        %558 = vmatpush2.bf16.msra.mxu0 0
        %559 = vmatprep.subr.bf16.mxu0 0
        %560 = vmatpush2.bf16.msra.mxu0 0
        %561 = vmatprep.subr.bf16.mxu0 0
        %562 = vmatpush2.bf16.msra.mxu0 0
        %563 = vmatprep.subr.bf16.mxu0 0
        %564 = vmatpush2.bf16.msra.mxu0 0
        %565 = vmatprep.subr.bf16.mxu0 0
        %566 = vmatpush2.bf16.msra.mxu0 0
        %567 = vmatprep.mubr.bf16.mxu0 0
        %568 = vmatmul.mubr.bf16.gmra.mxu0 %v534
        %v569 = vpop.f32.mrf.mxu0
        %v570 = vadd.f32 0.0, %v569
        %v571 = vpop.f32.mrf.mxu0
        %v572 = vpop.f32.mrf.mxu0
        %v573 = vpop.f32.mrf.mxu0
        %574 = vdwg.mxu0
        %v575 = vadd.f32 %v533, %v570
        %v576 = vtanh.pop %v575
        %s577 = scalar_lea.vmem %s211, 48 [#allocation2]
        %v578 = vld [vmem:[%s577] sm:$0xff]
        %v579 = vpack.c.bf16 %v576, %v576
        %580 = vmatprep.subr.bf16.mxu0 0
        %581 = vmatpush1.bf16.msra.mxu0 %v301
        %582 = vmatprep.subr.bf16.mxu0 0
        %583 = vmatpush1.bf16.msra.mxu0 %v300
        %584 = vmatprep.subr.bf16.mxu0 0
        %585 = vmatpush1.bf16.msra.mxu0 %v299
        %586 = vmatprep.subr.bf16.mxu0 0
        %587 = vmatpush1.bf16.msra.mxu0 %v298
        %588 = vmatprep.subr.bf16.mxu0 0
        %589 = vmatpush1.bf16.msra.mxu0 %v297
        %590 = vmatprep.subr.bf16.mxu0 0
        %591 = vmatpush1.bf16.msra.mxu0 %v296
        %592 = vmatprep.subr.bf16.mxu0 0
        %593 = vmatpush1.bf16.msra.mxu0 %v295
        %594 = vmatprep.subr.bf16.mxu0 0
        %595 = vmatpush1.bf16.msra.mxu0 %v294
        %596 = vmatprep.subr.bf16.mxu0 0
        %597 = vmatpush2.bf16.msra.mxu0 0
        %598 = vmatprep.subr.bf16.mxu0 0
        %599 = vmatpush2.bf16.msra.mxu0 0
        %600 = vmatprep.subr.bf16.mxu0 0
        %601 = vmatpush2.bf16.msra.mxu0 0
        %602 = vmatprep.subr.bf16.mxu0 0
        %603 = vmatpush2.bf16.msra.mxu0 0
        %604 = vmatprep.subr.bf16.mxu0 0
        %605 = vmatpush2.bf16.msra.mxu0 0
        %606 = vmatprep.subr.bf16.mxu0 0
        %607 = vmatpush2.bf16.msra.mxu0 0
        %608 = vmatprep.subr.bf16.mxu0 0
        %609 = vmatpush2.bf16.msra.mxu0 0
        %610 = vmatprep.subr.bf16.mxu0 0
        %611 = vmatpush2.bf16.msra.mxu0 0
        %612 = vmatprep.mubr.bf16.mxu0 0
        %613 = vmatmul.mubr.bf16.gmra.mxu0 %v579
        %v614 = vpop.f32.mrf.mxu0
        %v615 = vadd.f32 0.0, %v614
        %v616 = vpop.f32.mrf.mxu0
        %v617 = vpop.f32.mrf.mxu0
        %v618 = vpop.f32.mrf.mxu0
        %619 = vdwg.mxu0
        %v620 = vadd.f32 %v578, %v615
        %v621 = vtanh.pop %v620
        %s622 = scalar_lea.vmem %s211, 56 [#allocation2]
        %v623 = vld [vmem:[%s622] sm:$0xff]
        %v624 = vpack.c.bf16 %v621, %v621
        %625 = vmatprep.subr.bf16.mxu0 0
        %626 = vmatpush1.bf16.msra.mxu0 %v301
        %627 = vmatprep.subr.bf16.mxu0 0
        %628 = vmatpush1.bf16.msra.mxu0 %v300
        %629 = vmatprep.subr.bf16.mxu0 0
        %630 = vmatpush1.bf16.msra.mxu0 %v299
        %631 = vmatprep.subr.bf16.mxu0 0
        %632 = vmatpush1.bf16.msra.mxu0 %v298
        %633 = vmatprep.subr.bf16.mxu0 0
        %634 = vmatpush1.bf16.msra.mxu0 %v297
        %635 = vmatprep.subr.bf16.mxu0 0
        %636 = vmatpush1.bf16.msra.mxu0 %v296
        %637 = vmatprep.subr.bf16.mxu0 0
        %638 = vmatpush1.bf16.msra.mxu0 %v295
        %639 = vmatprep.subr.bf16.mxu0 0
        %640 = vmatpush1.bf16.msra.mxu0 %v294
        %641 = vmatprep.subr.bf16.mxu0 0
        %642 = vmatpush2.bf16.msra.mxu0 0
        %643 = vmatprep.subr.bf16.mxu0 0
        %644 = vmatpush2.bf16.msra.mxu0 0
        %645 = vmatprep.subr.bf16.mxu0 0
        %646 = vmatpush2.bf16.msra.mxu0 0
        %647 = vmatprep.subr.bf16.mxu0 0
        %648 = vmatpush2.bf16.msra.mxu0 0
        %649 = vmatprep.subr.bf16.mxu0 0
        %650 = vmatpush2.bf16.msra.mxu0 0
        %651 = vmatprep.subr.bf16.mxu0 0
        %652 = vmatpush2.bf16.msra.mxu0 0
        %653 = vmatprep.subr.bf16.mxu0 0
        %654 = vmatpush2.bf16.msra.mxu0 0
        %655 = vmatprep.subr.bf16.mxu0 0
        %656 = vmatpush2.bf16.msra.mxu0 0
        %657 = vmatprep.mubr.bf16.mxu0 0
        %658 = vmatmul.mubr.bf16.gmra.mxu0 %v624
        %v659 = vpop.f32.mrf.mxu0
        %v660 = vadd.f32 0.0, %v659
        %v661 = vpop.f32.mrf.mxu0
        %v662 = vpop.f32.mrf.mxu0
        %v663 = vpop.f32.mrf.mxu0
        %664 = vdwg.mxu0
        %v665 = vadd.f32 %v623, %v660
        %v666 = vtanh.pop %v665
        %v667 = vmax.f32 %v666, 0.0
        %v668 = vpack.c.bf16 %v667, %v667
        %v669 = vld [vmem:[#allocation7] sm:$0xf]
        %v670 = vld [vmem:[#allocation7 + $0x4] sm:$0xf]
        %v671 = vld [vmem:[#allocation7 + $0x8] sm:$0xf]
        %v672 = vld [vmem:[#allocation7 + $0xc] sm:$0xf]
        %v673 = vld [vmem:[#allocation7 + $0x10] sm:$0xf]
        %v674 = vld [vmem:[#allocation7 + $0x14] sm:$0xf]
        %v675 = vld [vmem:[#allocation7 + $0x18] sm:$0xf]
        %v676 = vld [vmem:[#allocation7 + $0x1c] sm:$0xf]
        %v677 = vld [vmem:[#allocation7 + $0x20] sm:$0xf]
        %v678 = vld [vmem:[#allocation7 + $0x24] sm:$0xf]
        %v679 = vld [vmem:[#allocation7 + $0x28] sm:$0xf]
        %v680 = vld [vmem:[#allocation7 + $0x2c] sm:$0xf]
        %v681 = vld [vmem:[#allocation7 + $0x30] sm:$0xf]
        %v682 = vld [vmem:[#allocation7 + $0x34] sm:$0xf]
        %v683 = vld [vmem:[#allocation7 + $0x38] sm:$0xf]
        %v684 = vld [vmem:[#allocation7 + $0x3c] sm:$0xf]
        %v685 = vld [vmem:[%s3] sm:$0x1]
        %v687 = vlaneseq
        %v688 = vshrl.u32 %v687, 7
        %v689 = vsub.s32 0, %v688
        %v690 = vrot.slane %v685, %v689
        %v708 = vunpack.c.l.b16 %v669
        %v709 = vunpack.c.l.b16 %v670
        %v710 = vunpack.c.l.b16 %v671
        %v711 = vunpack.c.l.b16 %v672
        %v712 = vunpack.c.l.b16 %v673
        %v713 = vunpack.c.l.b16 %v674
        %v714 = vunpack.c.l.b16 %v675
        %v715 = vunpack.c.l.b16 %v676
        %v716 = vunpack.c.l.b16 %v677
        %v717 = vunpack.c.l.b16 %v678
        %v718 = vunpack.c.l.b16 %v679
        %v719 = vunpack.c.l.b16 %v680
        %v720 = vunpack.c.l.b16 %v681
        %v721 = vunpack.c.l.b16 %v682
        %v722 = vunpack.c.l.b16 %v683
        %v723 = vunpack.c.l.b16 %v684
        %v724 = vpack.c.b16 %v709, %v708
        %v725 = vpack.c.b16 %v711, %v710
        %v726 = vpack.c.b16 %v713, %v712
        %v727 = vpack.c.b16 %v715, %v714
        %v728 = vpack.c.b16 %v717, %v716
        %v729 = vpack.c.b16 %v719, %v718
        %v730 = vpack.c.b16 %v721, %v720
        %v731 = vpack.c.b16 %v723, %v722
        %740 = vmatprep.subr.bf16.mxu0 0
        %741 = vmatpush1.bf16.msra.mxu0 %v731
        %742 = vmatprep.subr.bf16.mxu0 0
        %743 = vmatpush1.bf16.msra.mxu0 %v730
        %744 = vmatprep.subr.bf16.mxu0 0
        %745 = vmatpush1.bf16.msra.mxu0 %v729
        %746 = vmatprep.subr.bf16.mxu0 0
        %747 = vmatpush1.bf16.msra.mxu0 %v728
        %748 = vmatprep.subr.bf16.mxu0 0
        %749 = vmatpush1.bf16.msra.mxu0 %v727
        %750 = vmatprep.subr.bf16.mxu0 0
        %751 = vmatpush1.bf16.msra.mxu0 %v726
        %752 = vmatprep.subr.bf16.mxu0 0
        %753 = vmatpush1.bf16.msra.mxu0 %v725
        %754 = vmatprep.subr.bf16.mxu0 0
        %755 = vmatpush1.bf16.msra.mxu0 %v724
        %756 = vmatprep.subr.bf16.mxu0 0
        %757 = vmatpush2.bf16.msra.mxu0 0
        %758 = vmatprep.subr.bf16.mxu0 0
        %759 = vmatpush2.bf16.msra.mxu0 0
        %760 = vmatprep.subr.bf16.mxu0 0
        %761 = vmatpush2.bf16.msra.mxu0 0
        %762 = vmatprep.subr.bf16.mxu0 0
        %763 = vmatpush2.bf16.msra.mxu0 0
        %764 = vmatprep.subr.bf16.mxu0 0
        %765 = vmatpush2.bf16.msra.mxu0 0
        %766 = vmatprep.subr.bf16.mxu0 0
        %767 = vmatpush2.bf16.msra.mxu0 0
        %768 = vmatprep.subr.bf16.mxu0 0
        %769 = vmatpush2.bf16.msra.mxu0 0
        %770 = vmatprep.subr.bf16.mxu0 0
        %771 = vmatpush2.bf16.msra.mxu0 0
        %772 = vmatprep.mubr.bf16.mxu0 0
        %773 = vmatmul.mubr.bf16.gmra.mxu0 %v668
        %v774 = vpop.f32.mrf.mxu0
        %v775 = vadd.f32 %v690, %v774
        %v776 = vpop.f32.mrf.mxu0
        %v777 = vpop.f32.mrf.mxu0
        %v778 = vpop.f32.mrf.mxu0
        %779 = vdwg.mxu0
        %780 = vst [vmem:[%s243] sm:$0xff] %v775
        %s781 = sand.u32 %s119, 1
        %s782 = scalar_lea.sflag [#allocation4], %s781
        %s783 = sand.u32 %s119, 1
        %s784 = smul.addr %s783, 8
        %s785 = scalar_lea.vmem [#allocation8], %s784
        // Predicated region
        $region49: #{tpu_custom_call.1} parent=35 // pred_check
          %p786 = pneg %p129
        $region50: #{tpu_custom_call.1} parent=35 // pred_check_branch
          %788 = sbr.rel (%p786) target = $region52
        $region51: #{tpu_custom_call.1} parent=35 // pred_region
          %s790 = ssub.s32 128, 128
          %791 = vsyncadd %s782, %s790
          %s792 = smul.addr %s22, 128
          %s793 = scalar_lea.hbm %s4, %s792
          %s795 = sshll.u32 %s785, 4
          %s796 = int_to_ptr.vmem [resolvable:$true] %s795
          %798 = dma.vmem_to_hbm [thread:$0]  %s796, 128, %s793, %s782
        $region52: #{tpu_custom_call.1} parent=35 // pred_fallthru
          _
      $region36: #{tpu_custom_call.1} parent=5 // pred_fallthru
        _
      %p799 = scmp.le.s32.totalorder 2, %s17
      // Predicated region
      $region53: #{tpu_custom_call.1} parent=5 // pred_check
        %p800 = pneg %p799
      $region54: #{tpu_custom_call.1} parent=5 // pred_check_branch
        %802 = sbr.rel (%p800) target = $region56
      $region55: #{tpu_custom_call.1} parent=5 // pred_region
        %s803 = ssub.s32 %s17, 2
        // Predicated region
        $region57: #{tpu_custom_call.1} parent=55 // pred_check
          %p804 = pneg %p135
        $region58: #{tpu_custom_call.1} parent=55 // pred_check_branch
          %806 = sbr.rel (%p804) target = $region60
        $region59: #{tpu_custom_call.1} parent=55 // pred_region
          %s807 = sand.u32 %s120, 1
          %s808 = scalar_lea.sflag [#allocation4], %s807
          %s809 = sand.u32 %s120, 1
          %s810 = smul.addr %s809, 8
          %s811 = scalar_lea.vmem [#allocation8], %s810
          %812 = dma.done %s808, 128
        $region60: #{tpu_custom_call.1} parent=55 // pred_fallthru
          _
      $region56: #{tpu_custom_call.1} parent=5 // pred_fallthru
        _
    $region6: #{tpu_custom_call.1} parent=1 // loop_footer
      %s21 = sadd.s32 1, %s17
    $region7: #{tpu_custom_call.1} parent=1 // loop_footer_branch
      %16 = sbr.rel target = $region3
    $region8: #{tpu_custom_call.1} parent=1 // loop_exit
      _
    %813 = vsyncpa [#allocation3], 1
    %s814 = scalar_lea.sflag [#allocation3], 1
    %815 = vsyncpa %s814, 1
    %816 = vsyncpa [#allocation6], 1
    %817 = vsyncpa [#allocation4], 1
    %s818 = scalar_lea.sflag [#allocation4], 1
    %819 = vsyncpa %s818, 1

</llo_original>
